<compile_context>
chip_gen: v6e
topology: v6e:2x2x1
jax: 0.10.0
libtpu: 0.0.40
codegen_flags: <defaults>
</compile_context>

<pallas_src>
import functools

import jax
import jax.numpy as jnp
from jax.experimental import pallas as pl
from jax.experimental.pallas import tpu as pltpu


def _round_up(x, m):
    return (x + m - 1) // m * m


def _vmem_limit_bytes():
    # Leave headroom for compiler scratch + Pallas double buffers: never request
    # more than half of the physical per-core VMEM (v5e/v6e: 128 MiB -> 64 MiB,
    # v7x: 64 MiB -> 32 MiB).  Fall back to 32 MiB if the query is unavailable.
    try:
        return min(64 << 20, int(pltpu.get_tpu_info().vmem_capacity_bytes) // 2)
    except Exception:
        return 32 << 20


def fused_gcn_kernel(x_ref, w_ref, b_ref, adj_ref, o_ref, act_ref, h_ref,
                     *, num_layers, tile):
    l = pl.program_id(0)          # layer (sequential: carries act/h scratch)
    i = pl.program_id(1)          # output row tile
    k = pl.program_id(2)          # reduction tile over neighbours (innermost)
    nk = pl.num_programs(2)

    # One-time: stage the (padded) node features into the resident activation buffer.
    @pl.when((l == 0) & (i == 0) & (k == 0))
    def _():
        act_ref[...] = x_ref[...]

    # Once per layer: feature transform h_l = act_{l-1} @ W_l (small f32 MXU matmul),
    # stored in VMEM as bf16 so the big aggregation matmul runs on the bf16 MXU path.
    @pl.when((i == 0) & (k == 0))
    def _():
        h_ref[...] = jnp.dot(
            act_ref[...], w_ref[0], preferred_element_type=jnp.float32
        ).astype(jnp.bfloat16)

    # Reduction init: the resident f32 output block is the accumulator; fold the bias
    # broadcast into the init so it is not re-materialized every k iteration.
    @pl.when(k == 0)
    def _():
        o_ref[...] = jnp.broadcast_to(b_ref[0], o_ref.shape)

    # Aggregation: out[i] += adj[i, k] @ h[k]   (bf16 x bf16 -> f32 accumulation).
    k_start = pl.multiple_of(k * tile, tile)
    o_ref[...] += jnp.dot(
        adj_ref[...], h_ref[pl.ds(k_start, tile), :],
        preferred_element_type=jnp.float32,
    )

    # Finalize: every layer but the last applies ReLU and keeps its activation
    # resident in VMEM for the next layer's feature transform (no HBM round trip).
    @pl.when((k == nk - 1) & (l < num_layers - 1))
    def _():
        i_start = pl.multiple_of(i * tile, tile)
        act_ref[pl.ds(i_start, tile), :] = jnp.maximum(o_ref[...], 0.0)


def gcn_forward(x, adj, params, dropout_p=0.5, training=False):
    """Fused GCN forward: all layers in one pallas_call. Eval-mode semantics."""
    # TODO(synk): dropout is identity here (eval mode), matching F.dropout(training=False).
    del dropout_p, training

    n, in_c = x.shape
    num_layers = len(params)
    feat_dims = [in_c] + [w.shape[1] for (w, _) in params]
    out_c = feat_dims[-1]

    # Pad feature dims to a 128-lane multiple and nodes to a tile multiple.
    f_pad = _round_up(max(feat_dims), 128)
    tile = min(512, _round_up(n, 128))
    n_pad = _round_up(n, tile)

    x_p = jnp.zeros((n_pad, f_pad), jnp.float32).at[:n, :in_c].set(x)
    adj_p = jnp.zeros((n_pad, n_pad), jnp.bfloat16).at[:n, :n].set(
        adj.astype(jnp.bfloat16))  # 0/1 adjacency -> bf16 is exact, halves HBM traffic
    w_p = jnp.zeros((num_layers, f_pad, f_pad), jnp.float32)
    b_p = jnp.zeros((num_layers, 1, f_pad), jnp.float32)
    for li, (w, b) in enumerate(params):
        w_p = w_p.at[li, : w.shape[0], : w.shape[1]].set(w)
        b_p = b_p.at[li, :, : b.shape[1]].set(b)

    grid = (num_layers, n_pad // tile, n_pad // tile)
    kernel = functools.partial(fused_gcn_kernel, num_layers=num_layers, tile=tile)

    out_pad = pl.pallas_call(
        kernel,
        out_shape=jax.ShapeDtypeStruct((n_pad, f_pad), jnp.float32),
        grid_spec=pltpu.PrefetchScalarGridSpec(
            num_scalar_prefetch=0,
            grid=grid,
            in_specs=[
                # Node features: constant block index -> DMA'd once, stays in VMEM.
                pl.BlockSpec((n_pad, f_pad), lambda l, i, k: (0, 0)),
                # Per-layer weight / bias: re-DMA'd only when the layer index changes.
                pl.BlockSpec((1, f_pad, f_pad), lambda l, i, k: (l, 0, 0)),
                pl.BlockSpec((1, 1, f_pad), lambda l, i, k: (l, 0, 0)),
                # Adjacency tiles, auto double-buffered by the Pallas pipeline.
                pl.BlockSpec((tile, tile), lambda l, i, k: (i, k)),
            ],
            # Lane-dense (f_pad = multiple of 128) output; resident across k -> accumulator.
            out_specs=pl.BlockSpec((tile, f_pad), lambda l, i, k: (i, 0)),
            scratch_shapes=[
                pltpu.VMEM((n_pad, f_pad), jnp.float32),   # resident activations
                pltpu.VMEM((n_pad, f_pad), jnp.bfloat16),  # h_l = act @ W_l (MXU operand)
            ],
        ),
        compiler_params=pltpu.CompilerParams(
            # Layer / row axes carry the VMEM-resident activation across iterations,
            # so they must stay sequential; k is the reduction axis.
            dimension_semantics=("arbitrary", "arbitrary", "arbitrary"),
            vmem_limit_bytes=_vmem_limit_bytes(),
        ),
    )(x_p, w_p, b_p, adj_p)

    return out_pad[:n, :out_c]


def init_gcn_params(key, in_channels, hidden_channels, out_channels, num_layers):
    """Deterministic Glorot-uniform weights, zero biases (matches GCNConv defaults)."""
    dims = [in_channels] + [hidden_channels] * (num_layers - 1) + [out_channels]
    params = []
    for i in range(num_layers):
        key, sub = jax.random.split(key)
        f_in, f_out = dims[i], dims[i + 1]
        limit = (6.0 / (f_in + f_out)) ** 0.5
        w = jax.random.uniform(sub, (f_in, f_out), jnp.float32, -limit, limit)
        b = jnp.zeros((1, f_out), jnp.float32)
        params.append((w, b))
    return params


def gcn_reference(x, adj, params):
    """Plain-JAX reference mirroring the kernel's precision (bf16 adj/h, f32 accumulation)."""
    adj_bf = adj.astype(jnp.bfloat16)
    h = x
    for li, (w, b) in enumerate(params):
        t = jnp.dot(h, w, preferred_element_type=jnp.float32).astype(jnp.bfloat16)
        h = jnp.dot(adj_bf, t, preferred_element_type=jnp.float32) + b
        if li < len(params) - 1:
            h = jnp.maximum(h, 0.0)
    return h


if __name__ == "__main__":
    # Small synthetic problem: 64 nodes, in=16, hidden=32, out=8, 3 layers.
    N, IN_C, HID_C, OUT_C, NUM_LAYERS, DROPOUT = 64, 16, 32, 8, 3, 0.5

    key = jax.random.PRNGKey(0)
    kx, kadj, kparams = jax.random.split(key, 3)

    x = jax.random.normal(kx, (N, IN_C), jnp.float32)
    # Dense symmetric-ish binary adjacency with self loops (exact in bf16).
    adj = (jax.random.uniform(kadj, (N, N)) < 0.1).astype(jnp.float32)
    adj = jnp.maximum(adj, adj.T)
    adj = jnp.maximum(adj, jnp.eye(N, dtype=jnp.float32))

    params = init_gcn_params(kparams, IN_C, HID_C, OUT_C, NUM_LAYERS)

    out = gcn_forward(x, adj, params, dropout_p=DROPOUT, training=False)
    out = jax.block_until_ready(out)

    ref = gcn_reference(x, adj, params)
    assert out.shape == (N, OUT_C)
    assert jnp.allclose(out, ref, atol=2e-2, rtol=2e-2)

    print("KERNEL_OK")
</pallas_src>

<mosaic_0001>
module attributes {stable_mosaic.version = 11 : i64} {
  func.func @fused_gcn_kernel(%arg0: i32, %arg1: i32, %arg2: i32, %arg3: memref<128x128xf32, #tpu.memory_space<vmem>>, %arg4: memref<1x128x128xf32, #tpu.memory_space<vmem>>, %arg5: memref<1x1x128xf32, #tpu.memory_space<vmem>>, %arg6: memref<128x128xbf16, #tpu.memory_space<vmem>>, %arg7: memref<128x128xf32, #tpu.memory_space<vmem>>, %arg8: memref<128x128xf32, #tpu.memory_space<vmem>>, %arg9: memref<128x128xbf16, #tpu.memory_space<vmem>>) attributes {dimension_semantics = [#tpu.dimension_semantics<arbitrary>, #tpu.dimension_semantics<arbitrary>, #tpu.dimension_semantics<arbitrary>], iteration_bounds = array<i64: 3, 1, 1>, scalar_prefetch = 0 : i64, scratch_operands = 2 : i64, tpu.core_type = #tpu.core_type<tc>, window_params = [{pipeline_mode = #tpu.pipeline_mode<synchronous>, transform_indices = @transform_0, window_bounds = array<i64: 128, 128>}, {transform_indices = @transform_1, window_bounds = array<i64: 1, 128, 128>}, {transform_indices = @transform_2, window_bounds = array<i64: 1, 1, 128>}, {transform_indices = @transform_3, window_bounds = array<i64: 128, 128>}, {transform_indices = @transform_4, window_bounds = array<i64: 128, 128>}]} {
    %c0_i32 = arith.constant 0 : i32
    %0 = arith.cmpi eq, %arg0, %c0_i32 : i32
    %c0_i32_0 = arith.constant 0 : i32
    %1 = arith.cmpi eq, %arg1, %c0_i32_0 : i32
    %2 = arith.andi %0, %1 : i1
    %c0_i32_1 = arith.constant 0 : i32
    %3 = arith.cmpi eq, %arg2, %c0_i32_1 : i32
    %4 = arith.andi %2, %3 : i1
    %5 = arith.extui %4 : i1 to i32
    %c0_i32_2 = arith.constant 0 : i32
    %6 = arith.cmpi ne, %5, %c0_i32_2 : i32
    scf.if %6 {
      %c0_16 = arith.constant 0 : index
      %c0_17 = arith.constant 0 : index
      %29 = vector.load %arg3[%c0_16, %c0_17] : memref<128x128xf32, #tpu.memory_space<vmem>>, vector<128x128xf32>
      %c0_18 = arith.constant 0 : index
      %c0_19 = arith.constant 0 : index
      %30 = vector.load %arg8[%c0_18, %c0_19] : memref<128x128xf32, #tpu.memory_space<vmem>>, vector<128x128xf32>
      tpu.vector_store %arg8[%c0_18, %c0_19], %29 {strides = array<i32>} : memref<128x128xf32, #tpu.memory_space<vmem>>, vector<128x128xf32>,
    } else {
    }
    %c0_i32_3 = arith.constant 0 : i32
    %7 = arith.cmpi eq, %arg1, %c0_i32_3 : i32
    %c0_i32_4 = arith.constant 0 : i32
    %8 = arith.cmpi eq, %arg2, %c0_i32_4 : i32
    %9 = arith.andi %7, %8 : i1
    %10 = arith.extui %9 : i1 to i32
    %c0_i32_5 = arith.constant 0 : i32
    %11 = arith.cmpi ne, %10, %c0_i32_5 : i32
    scf.if %11 {
      %c0_16 = arith.constant 0 : index
      %c0_17 = arith.constant 0 : index
      %29 = vector.load %arg8[%c0_16, %c0_17] : memref<128x128xf32, #tpu.memory_space<vmem>>, vector<128x128xf32>
      %c0_18 = arith.constant 0 : index
      %c0_19 = arith.constant 0 : index
      %c0_20 = arith.constant 0 : index
      %30 = vector.load %arg4[%c0_18, %c0_19, %c0_20] : memref<1x128x128xf32, #tpu.memory_space<vmem>>, vector<1x128x128xf32>
      %31 = vector.shape_cast %30 : vector<1x128x128xf32> to vector<128x128xf32>
      %cst_21 = arith.constant dense<0.000000e+00> : vector<128x128xf32>
      %32 = tpu.matmul %29, %31, %cst_21 {dimension_numbers = #tpu.dot_dimension_numbers<[1], [0], [0], [1], [0, 0, 1, 1], [], []>} : vector<128x128xf32>, vector<128x128xf32>, vector<128x128xf32> -> vector<128x128xf32>
      %33 = arith.truncf %32 : vector<128x128xf32> to vector<128x128xbf16>
      %c0_22 = arith.constant 0 : index
      %c0_23 = arith.constant 0 : index
      %34 = vector.load %arg9[%c0_22, %c0_23] : memref<128x128xbf16, #tpu.memory_space<vmem>>, vector<128x128xbf16>
      tpu.vector_store %arg9[%c0_22, %c0_23], %33 {strides = array<i32>} : memref<128x128xbf16, #tpu.memory_space<vmem>>, vector<128x128xbf16>,
    } else {
    }
    %c0_i32_6 = arith.constant 0 : i32
    %12 = arith.cmpi eq, %arg2, %c0_i32_6 : i32
    %13 = arith.extui %12 : i1 to i32
    %c0_i32_7 = arith.constant 0 : i32
    %14 = arith.cmpi ne, %13, %c0_i32_7 : i32
    scf.if %14 {
      %c0_16 = arith.constant 0 : index
      %c0_17 = arith.constant 0 : index
      %c0_18 = arith.constant 0 : index
      %29 = vector.load %arg5[%c0_16, %c0_17, %c0_18] : memref<1x1x128xf32, #tpu.memory_space<vmem>>, vector<1x1x128xf32>
      %30 = vector.shape_cast %29 : vector<1x1x128xf32> to vector<1x128xf32>
      %31 = vector.shape_cast %30 : vector<1x128xf32> to vector<1x128xf32>
      %32 = vector.broadcast %31 : vector<1x128xf32> to vector<128x128xf32>
      %c0_19 = arith.constant 0 : index
      %c0_20 = arith.constant 0 : index
      %33 = vector.load %arg7[%c0_19, %c0_20] : memref<128x128xf32, #tpu.memory_space<vmem>>, vector<128x128xf32>
      tpu.vector_store %arg7[%c0_19, %c0_20], %32 {strides = array<i32>} : memref<128x128xf32, #tpu.memory_space<vmem>>, vector<128x128xf32>,
    } else {
    }
    %c128_i32 = arith.constant 128 : i32
    %15 = arith.muli %arg2, %c128_i32 : i32
    %16 = tpu.assume_multiple %15, 128 : i32
    %c0 = arith.constant 0 : index
    %c0_8 = arith.constant 0 : index
    %17 = vector.load %arg7[%c0, %c0_8] : memref<128x128xf32, #tpu.memory_space<vmem>>, vector<128x128xf32>
    %c0_9 = arith.constant 0 : index
    %c0_10 = arith.constant 0 : index
    %18 = vector.load %arg6[%c0_9, %c0_10] : memref<128x128xbf16, #tpu.memory_space<vmem>>, vector<128x128xbf16>
    %19 = arith.index_cast %16 : i32 to index
    %c0_11 = arith.constant 0 : index
    %20 = vector.load %arg9[%19, %c0_11] : memref<128x128xbf16, #tpu.memory_space<vmem>>, vector<128x128xbf16>
    %cst = arith.constant dense<0.000000e+00> : vector<128x128xf32>
    %21 = tpu.matmul %18, %20, %cst {dimension_numbers = #tpu.dot_dimension_numbers<[1], [0], [0], [1], [0, 0, 1, 1], [], []>} : vector<128x128xbf16>, vector<128x128xbf16>, vector<128x128xf32> -> vector<128x128xf32>
    %22 = arith.addf %17, %21 : vector<128x128xf32>
    %c0_12 = arith.constant 0 : index
    %c0_13 = arith.constant 0 : index
    %23 = vector.load %arg7[%c0_12, %c0_13] : memref<128x128xf32, #tpu.memory_space<vmem>>, vector<128x128xf32>
    tpu.vector_store %arg7[%c0_12, %c0_13], %22 {strides = array<i32>} : memref<128x128xf32, #tpu.memory_space<vmem>>, vector<128x128xf32>,
    %c0_i32_14 = arith.constant 0 : i32
    %24 = arith.cmpi eq, %arg2, %c0_i32_14 : i32
    %c2_i32 = arith.constant 2 : i32
    %25 = arith.cmpi slt, %arg0, %c2_i32 : i32
    %26 = arith.andi %24, %25 : i1
    %27 = arith.extui %26 : i1 to i32
    %c0_i32_15 = arith.constant 0 : i32
    %28 = arith.cmpi ne, %27, %c0_i32_15 : i32
    scf.if %28 {
      %c128_i32_16 = arith.constant 128 : i32
      %29 = arith.muli %arg1, %c128_i32_16 : i32
      %30 = tpu.assume_multiple %29, 128 : i32
      %c0_17 = arith.constant 0 : index
      %c0_18 = arith.constant 0 : index
      %31 = vector.load %arg7[%c0_17, %c0_18] : memref<128x128xf32, #tpu.memory_space<vmem>>, vector<128x128xf32>
      %cst_19 = arith.constant 0.000000e+00 : f32
      %32 = vector.broadcast %cst_19 : f32 to vector<128x128xf32>
      %33 = arith.maximumf %31, %32 : vector<128x128xf32>
      %34 = arith.index_cast %30 : i32 to index
      %c0_20 = arith.constant 0 : index
      %35 = vector.load %arg8[%34, %c0_20] : memref<128x128xf32, #tpu.memory_space<vmem>>, vector<128x128xf32>
      tpu.vector_store %arg8[%34, %c0_20], %33 {strides = array<i32>} : memref<128x128xf32, #tpu.memory_space<vmem>>, vector<128x128xf32>,
    } else {
    }
    return
  }
  func.func @transform_0(%arg0: i32, %arg1: i32, %arg2: i32) -> (i32, i32) {
    %c0_i32 = arith.constant 0 : i32
    %c0_i32_0 = arith.constant 0 : i32
    %c0_i32_1 = arith.constant 0 : i32
    return %c0_i32, %c0_i32_0 : i32, i32
  }
  func.func @transform_1(%arg0: i32, %arg1: i32, %arg2: i32) -> (i32, i32, i32) {
    %c0_i32 = arith.constant 0 : i32
    %c0_i32_0 = arith.constant 0 : i32
    %c0_i32_1 = arith.constant 0 : i32
    return %arg0, %c0_i32, %c0_i32_0 : i32, i32, i32
  }
  func.func @transform_2(%arg0: i32, %arg1: i32, %arg2: i32) -> (i32, i32, i32) {
    %c0_i32 = arith.constant 0 : i32
    %c0_i32_0 = arith.constant 0 : i32
    %c0_i32_1 = arith.constant 0 : i32
    return %arg0, %c0_i32, %c0_i32_0 : i32, i32, i32
  }
  func.func @transform_3(%arg0: i32, %arg1: i32, %arg2: i32) -> (i32, i32) {
    %c0_i32 = arith.constant 0 : i32
    return %arg1, %arg2 : i32, i32
  }
  func.func @transform_4(%arg0: i32, %arg1: i32, %arg2: i32) -> (i32, i32) {
    %c0_i32 = arith.constant 0 : i32
    %c0_i32_0 = arith.constant 0 : i32
    return %arg1, %c0_i32 : i32, i32
  }
}

</mosaic_0001>

<llo_original>
// kernel: tpu_custom_call.1
$region0: #{tpu_custom_call.1}
  #allocation0 [shape = 'u32[]', space=smem, size = 0x4, offset = 0x4, fixed_abs, tag = 'smem constant byte address 0x4 - core index']
  #allocation1 [shape = 'u32[144,128]{1,0:T(1,128)}', space=vmem, size = 0x12000, scoped, tag = 'internal scratch']
  #allocation2 [shape = 'f32[128,128]{1,0:T(8,128)}', space=vmem, size = 0x10000, scoped, tag = 'scratch operand']
  #allocation3 [shape = 'bf16[128,128]{1,0:T(8,128)(2,1)}', space=vmem, size = 0x8000, scoped, tag = 'scratch operand']
  %s0 = inlined_call_operand.hbm [shape: f32[128,128], index: 0, kind: input, shape index: {}]
  %s1 = inlined_call_operand.hbm [shape: f32[3,128,128], index: 1, kind: input, shape index: {}]
  %s2 = inlined_call_operand.vmem [shape: f32[3,1,128], index: 2, kind: input, shape index: {}]
  %s3 = inlined_call_operand.hbm [shape: bf16[128,128], index: 3, kind: input, shape index: {}]
  %s4 = inlined_call_operand.hbm [shape: f32[128,128], index: 4, kind: output, shape index: {}]
  %s5 = sld [smem:[#allocation0]]
  $region77: #{tpu_custom_call.1} parent=0
    _
  %s7 = ssub.s32 1, %s5
  %s8 = scalar_select 0, %s7, %s5
  $region1: #{tpu_custom_call.1} parent=0
    #allocation4 [shape = 'u8[65536]{0}', space=vmem, size = 0x10000, scoped, tag = 'input window, operand 0, single buffered']
    #allocation5 [shape = 's32[2]{0}', space=sflag, size = 0x8, scoped, tag = 'scoped memory for tpu_custom_call.1']
    #allocation6 [shape = 's32[2]{0}', space=sflag, size = 0x8, scoped, tag = 'scoped memory for tpu_custom_call.1']
    #allocation7 [shape = 'u8[131072]{0}', space=vmem, size = 0x20000, scoped, tag = 'input window, operand 1']
    #allocation8 [shape = 's32[2]{0}', space=sflag, size = 0x8, scoped, tag = 'scoped memory for tpu_custom_call.1']
    #allocation9 [shape = 'u8[32768]{0}', space=vmem, size = 0x8000, scoped, tag = 'input window, operand 3, single buffered']
    #allocation10 [shape = 'u8[65536]{0}', space=vmem, size = 0x10000, scoped, tag = 'output window, operand 0, single buffered']
    %9 = vsyncpa [#allocation5], 0
    %10 = vsyncpa [#allocation8], 0
    %s11 = scalar_lea.sflag [#allocation8], 1
    %12 = vsyncpa %s11, 0
    %13 = vsyncpa [#allocation6], 0
    loop: start=0, step=1, limit=5
    $region2: #{tpu_custom_call.1} parent=1 // loop_pre_header
      _
    $region3: #{tpu_custom_call.1} parent=1 // loop_header
      %s15 = sphi 0, %s19
      %p16 = scmp.ge.s32.totalorder %s15, 5
      %s22 = sphi 0, %s41
      %s23 = sphi 0, %s37
      %s24 = sphi 0, %s33
      %s25 = sphi 0, %s22
      %s26 = sphi 0, %s23
      %s27 = sphi 0, %s24
      %s28 = sphi 0, %s25
      %s29 = sphi 0, %s26
      %s30 = sphi 0, %s27
      %s42 = sphi 0, %s42
      %s44 = sphi 0, %s42
      %s45 = sphi 0, %s44
      %s59 = sphi 0, %s45
      %s65 = sphi 0, %s67
      %s68 = sphi 0, %s65
      %s69 = sphi 0, %s68
      %s85 = sphi 0, %s69
      %s91 = sphi 0, %s93
      %s94 = sphi 0, %s91
      %s95 = sphi 0, %s94
      %s111 = sphi 0, %s95
      %s119 = sphi 0, %s121
      %s122 = sphi 0, %s119
      %s123 = sphi 0, %s122
      %s139 = sphi 0, %s123
      %s145 = sphi 0, %s147
      %s148 = sphi 0, %s145
      %s149 = sphi 0, %s148
      %s165 = sphi 0, %s149
    $region4: #{tpu_custom_call.1} parent=1 // loop_header_branch
      %18 = sbr.rel (%p16) target = $region8
    $region5: #{tpu_custom_call.1} parent=1 // loop_body
      %s20 = ssub.s32 %s15, 1
      %s21 = ssub.s32 %s15, 2
      %s31 = sadd.s32 1, %s24
      %p32 = scmp.ge.s32.totalorder %s31, 1
      %s33 = scalar_select %p32, 0, %s31
      %s34 = sadd.s32 1, %s23
      %s35 = scalar_select %p32, %s34, %s23
      %p36 = scmp.ge.s32.totalorder %s35, 1
      %s37 = scalar_select %p36, 0, %s35
      %s38 = sadd.s32 1, %s22
      %s39 = scalar_select %p36, %s38, %s22
      %p40 = scmp.ge.s32.totalorder %s39, 3
      %s41 = scalar_select %p40, 0, %s39
      %s43 = sadd.s32 %s42, 1
      %p46 = scmp.eq.s32.totalorder %s15, 2
      %p47 = scmp.ne.s32.totalorder %s42, %s44
      %p48 = scmp.eq.s32.totalorder %s15, 0
      %p49 = por %p47, %p48
      %p50 = scmp.ne.s32.totalorder %s42, %s44
      %p51 = scmp.eq.s32.totalorder %s20, 2
      %p52 = por %p50, %p51
      %p53 = scmp.ne.s32.totalorder %s44, %s45
      %p54 = scmp.eq.s32.totalorder %s20, 0
      %p55 = por %p53, %p54
      %p56 = scmp.ne.s32.totalorder %s44, %s45
      %p57 = scmp.eq.s32.totalorder %s21, 2
      %p58 = por %p56, %p57
      %p60 = scmp.ne.s32.totalorder %s45, %s59
      %p61 = scmp.eq.s32.totalorder %s21, 0
      %p62 = por %p60, %p61
      %s63 = ssub.s32 %s22, %s41
      %p64 = scmp.eq.s32.totalorder %s63, 0
      %s66 = sadd.s32 %s65, 1
      %s67 = scalar_select %p64, %s65, %s66
      %p70 = pneg %p64
      %p71 = scmp.eq.s32.totalorder %s15, 2
      %p72 = por %p70, %p71
      %p73 = scmp.ne.s32.totalorder %s65, %s68
      %p74 = scmp.eq.s32.totalorder %s15, 0
      %p75 = por %p73, %p74
      %p76 = scmp.ne.s32.totalorder %s65, %s68
      %p77 = scmp.eq.s32.totalorder %s20, 2
      %p78 = por %p76, %p77
      %p79 = scmp.ne.s32.totalorder %s68, %s69
      %p80 = scmp.eq.s32.totalorder %s20, 0
      %p81 = por %p79, %p80
      %p82 = scmp.ne.s32.totalorder %s68, %s69
      %p83 = scmp.eq.s32.totalorder %s21, 2
      %p84 = por %p82, %p83
      %p86 = scmp.ne.s32.totalorder %s69, %s85
      %p87 = scmp.eq.s32.totalorder %s21, 0
      %p88 = por %p86, %p87
      %s89 = ssub.s32 %s22, %s41
      %p90 = scmp.eq.s32.totalorder %s89, 0
      %s92 = sadd.s32 %s91, 1
      %s93 = scalar_select %p90, %s91, %s92
      %p96 = pneg %p90
      %p97 = scmp.eq.s32.totalorder %s15, 2
      %p98 = por %p96, %p97
      %p99 = scmp.ne.s32.totalorder %s91, %s94
      %p100 = scmp.eq.s32.totalorder %s15, 0
      %p101 = por %p99, %p100
      %p102 = scmp.ne.s32.totalorder %s91, %s94
      %p103 = scmp.eq.s32.totalorder %s20, 2
      %p104 = por %p102, %p103
      %p105 = scmp.ne.s32.totalorder %s94, %s95
      %p106 = scmp.eq.s32.totalorder %s20, 0
      %p107 = por %p105, %p106
      %p108 = scmp.ne.s32.totalorder %s94, %s95
      %p109 = scmp.eq.s32.totalorder %s21, 2
      %p110 = por %p108, %p109
      %p112 = scmp.ne.s32.totalorder %s95, %s111
      %p113 = scmp.eq.s32.totalorder %s21, 0
      %p114 = por %p112, %p113
      %s115 = ssub.s32 %s23, %s37
      %s116 = ssub.s32 %s24, %s33
      %s117 = sor.u32 %s115, %s116
      %p118 = scmp.eq.s32.totalorder %s117, 0
      %s120 = sadd.s32 %s119, 1
      %s121 = scalar_select %p118, %s119, %s120
      %p124 = pneg %p118
      %p125 = scmp.eq.s32.totalorder %s15, 2
      %p126 = por %p124, %p125
      %p127 = scmp.ne.s32.totalorder %s119, %s122
      %p128 = scmp.eq.s32.totalorder %s15, 0
      %p129 = por %p127, %p128
      %p130 = scmp.ne.s32.totalorder %s119, %s122
      %p131 = scmp.eq.s32.totalorder %s20, 2
      %p132 = por %p130, %p131
      %p133 = scmp.ne.s32.totalorder %s122, %s123
      %p134 = scmp.eq.s32.totalorder %s20, 0
      %p135 = por %p133, %p134
      %p136 = scmp.ne.s32.totalorder %s122, %s123
      %p137 = scmp.eq.s32.totalorder %s21, 2
      %p138 = por %p136, %p137
      %p140 = scmp.ne.s32.totalorder %s123, %s139
      %p141 = scmp.eq.s32.totalorder %s21, 0
      %p142 = por %p140, %p141
      %s143 = ssub.s32 %s23, %s37
      %p144 = scmp.eq.s32.totalorder %s143, 0
      %s146 = sadd.s32 %s145, 1
      %s147 = scalar_select %p144, %s145, %s146
      %p150 = pneg %p144
      %p151 = scmp.eq.s32.totalorder %s15, 2
      %p152 = por %p150, %p151
      %p153 = scmp.ne.s32.totalorder %s145, %s148
      %p154 = scmp.eq.s32.totalorder %s15, 0
      %p155 = por %p153, %p154
      %p156 = scmp.ne.s32.totalorder %s145, %s148
      %p157 = scmp.eq.s32.totalorder %s20, 2
      %p158 = por %p156, %p157
      %p159 = scmp.ne.s32.totalorder %s148, %s149
      %p160 = scmp.eq.s32.totalorder %s20, 0
      %p161 = por %p159, %p160
      %p162 = scmp.ne.s32.totalorder %s148, %s149
      %p163 = scmp.eq.s32.totalorder %s21, 2
      %p164 = por %p162, %p163
      %p166 = scmp.ne.s32.totalorder %s149, %s165
      %p167 = scmp.eq.s32.totalorder %s21, 0
      %p168 = por %p166, %p167
      %p169 = scmp.le.s32.totalorder 1, %s15
      %p170 = scmp.lt.s32.totalorder %s15, 4
      %p171 = pnand %p169, %p170
      %p172 = pneg %p171
      // Predicated region
      $region9: #{tpu_custom_call.1} parent=5 // pred_check
        _
      $region10: #{tpu_custom_call.1} parent=5 // pred_check_branch
        %174 = sbr.rel (%p171) target = $region12
      $region11: #{tpu_custom_call.1} parent=5 // pred_region
        %s175 = ssub.s32 %s15, 1
        // Predicated region
        $region13: #{tpu_custom_call.1} parent=11 // pred_check
          %p176 = pneg %p55
        $region14: #{tpu_custom_call.1} parent=11 // pred_check_branch
          %178 = sbr.rel (%p176) target = $region16
        $region15: #{tpu_custom_call.1} parent=11 // pred_region
          %s180 = ssub.s32 2048, 2048
          %181 = vsyncadd [#allocation5], %s180
          %s182 = sshll.u32 [#allocation4], 4
          %s183 = int_to_ptr.vmem [resolvable:$true] %s182
          %188 = dma.hbm_to_vmem [thread:$0]  %s0, 2048, %s183, [#allocation5], 128, 128, 8
        $region16: #{tpu_custom_call.1} parent=11 // pred_fallthru
          _
        // Predicated region
        $region17: #{tpu_custom_call.1} parent=11 // pred_check
          %p189 = pneg %p135
        $region18: #{tpu_custom_call.1} parent=11 // pred_check_branch
          %191 = sbr.rel (%p189) target = $region20
        $region19: #{tpu_custom_call.1} parent=11 // pred_region
          %s192 = smul.u32 16, %s26
          %s194 = ssub.s32 1024, 1024
          %195 = vsyncadd [#allocation8], %s194
          %s196 = sadd.s32 %s27, %s192
          %s197 = smul.addr %s196, 64
          %s198 = scalar_lea.hbm %s3, %s197
          %s199 = sshll.u32 [#allocation9], 4
          %s200 = int_to_ptr.vmem [resolvable:$true] %s199
          %205 = dma.hbm_to_vmem [thread:$0]  %s198, 1024, %s200, [#allocation8], 64, 64, 4
        $region20: #{tpu_custom_call.1} parent=11 // pred_fallthru
          _
      $region12: #{tpu_custom_call.1} parent=5 // pred_fallthru
        _
      %p206 = scmp.lt.s32.totalorder %s15, 3
      // Predicated region
      $region21: #{tpu_custom_call.1} parent=5 // pred_check
        %p207 = pneg %p206
      $region22: #{tpu_custom_call.1} parent=5 // pred_check_branch
        %209 = sbr.rel (%p207) target = $region24
      $region23: #{tpu_custom_call.1} parent=5 // pred_region
        // Predicated region
        $region25: #{tpu_custom_call.1} parent=23 // pred_check
          %p210 = pneg %p75
        $region26: #{tpu_custom_call.1} parent=23 // pred_check_branch
          %212 = sbr.rel (%p210) target = $region28
        $region27: #{tpu_custom_call.1} parent=23 // pred_region
          %s213 = sand.u32 %s15, 1
          %s214 = scalar_lea.sflag [#allocation8], %s213
          %s215 = sand.u32 %s65, 1
          %s216 = smul.addr %s215, 128
          %s217 = scalar_lea.vmem [#allocation7], %s216
          %s219 = ssub.s32 2048, 2048
          %220 = vsyncadd %s214, %s219
          %s221 = smul.addr %s22, 16
          %s222 = smul.addr %s221, 128
          %s223 = scalar_lea.hbm %s1, %s222
          %s224 = sshll.u32 %s217, 4
          %s225 = int_to_ptr.vmem [resolvable:$true] %s224
          %230 = dma.hbm_to_vmem [thread:$0]  %s223, 2048, %s225, %s214, 128, 128, 8
        $region28: #{tpu_custom_call.1} parent=23 // pred_fallthru
          _
        // Predicated region
        $region29: #{tpu_custom_call.1} parent=23 // pred_check
          %p231 = pneg %p101
        $region30: #{tpu_custom_call.1} parent=23 // pred_check_branch
          %233 = sbr.rel (%p231) target = $region32
        $region31: #{tpu_custom_call.1} parent=23 // pred_region
          %p234 = scmp.lt.s32.totalorder %s22, 2
          %s235 = scalar_select %p234, %s22, 2
          %s236 = scalar_lea.vmem %s2, %s235
        $region32: #{tpu_custom_call.1} parent=23 // pred_fallthru
          _
      $region24: #{tpu_custom_call.1} parent=5 // pred_fallthru
        _
      %p237 = scmp.le.s32.totalorder 1, %s15
      %p238 = scmp.lt.s32.totalorder %s15, 4
      %p239 = pnand %p237, %p238
      %p240 = pneg %p239
      // Predicated region
      $region33: #{tpu_custom_call.1} parent=5 // pred_check
        _
      $region34: #{tpu_custom_call.1} parent=5 // pred_check_branch
        %242 = sbr.rel (%p239) target = $region36
      $region35: #{tpu_custom_call.1} parent=5 // pred_region
        %s243 = ssub.s32 %s15, 1
        // Predicated region
        $region37: #{tpu_custom_call.1} parent=35 // pred_check
          %p244 = pneg %p55
        $region38: #{tpu_custom_call.1} parent=35 // pred_check_branch
          %246 = sbr.rel (%p244) target = $region40
        $region39: #{tpu_custom_call.1} parent=35 // pred_region
          %247 = dma.done [#allocation5], 2048
        $region40: #{tpu_custom_call.1} parent=35 // pred_fallthru
          _
        %s248 = sand.u32 %s20, 1
        %s249 = scalar_lea.sflag [#allocation8], %s248
        %s250 = sand.u32 %s68, 1
        %s251 = smul.addr %s250, 128
        %s252 = scalar_lea.vmem [#allocation7], %s251
        // Predicated region
        $region41: #{tpu_custom_call.1} parent=35 // pred_check
          %p253 = pneg %p81
        $region42: #{tpu_custom_call.1} parent=35 // pred_check_branch
          %255 = sbr.rel (%p253) target = $region44
        $region43: #{tpu_custom_call.1} parent=35 // pred_region
          %256 = dma.done %s249, 2048
        $region44: #{tpu_custom_call.1} parent=35 // pred_fallthru
          _
        // Predicated region
        $region45: #{tpu_custom_call.1} parent=35 // pred_check
          %p257 = pneg %p135
        $region46: #{tpu_custom_call.1} parent=35 // pred_check_branch
          %259 = sbr.rel (%p257) target = $region48
        $region47: #{tpu_custom_call.1} parent=35 // pred_region
          %260 = dma.done [#allocation8], 1024
        $region48: #{tpu_custom_call.1} parent=35 // pred_fallthru
          _
        %p261 = pneg %p55
        %p262 = pneg %p52
        %s263 = sand.u32 %s20, 1
        %s264 = scalar_lea.sflag [#allocation8], %s263
        %s265 = sand.u32 %s68, 1
        %s266 = smul.addr %s265, 128
        %s267 = scalar_lea.vmem [#allocation7], %s266
        %p268 = pneg %p81
        %p269 = pneg %p78
        %p270 = scmp.lt.s32.totalorder %s25, 2
        %s271 = scalar_select %p270, %s25, 2
        %s272 = scalar_lea.vmem %s2, %s271
        %p273 = pneg %p107
        %p274 = pneg %p104
        %p275 = pneg %p135
        %p276 = pneg %p132
        %p277 = pneg %p161
        %p278 = pneg %p158
        %p279 = scmp.lt.s32.totalorder %s25, 2
        %s280 = scalar_select %p279, %s25, 2
        %s281 = scalar_lea.vmem %s2, %s280
        %s282 = smul.u32 16, %s26
        %s283 = smul.u32 16, %s26
        %p285 = scmp.eq.s32.totalorder %s25, 0
        %p286 = scmp.eq.s32.totalorder %s26, 0
        %p287 = pnand %p285, %p286
        %p288 = pneg %p287
        %p289 = scmp.eq.s32.totalorder %s27, 0
        %p290 = pnand %p288, %p289
        %p291 = pneg %p290
        // Predicated region
        $region49: #{tpu_custom_call.1} parent=35 // pred_check
          _
        $region50: #{tpu_custom_call.1} parent=35 // pred_check_branch
          %293 = sbr.rel (%p290) target = $region52
        $region51: #{tpu_custom_call.1} parent=35 // pred_region
          %v294 = vld [vmem:[#allocation4] sm:$0xff]
          %v295 = vld [vmem:[#allocation4 + $0x8] sm:$0xff]
          %v296 = vld [vmem:[#allocation4 + $0x10] sm:$0xff]
          %v297 = vld [vmem:[#allocation4 + $0x18] sm:$0xff]
          %v298 = vld [vmem:[#allocation4 + $0x20] sm:$0xff]
          %v299 = vld [vmem:[#allocation4 + $0x28] sm:$0xff]
          %v300 = vld [vmem:[#allocation4 + $0x30] sm:$0xff]
          %v301 = vld [vmem:[#allocation4 + $0x38] sm:$0xff]
          %v302 = vld [vmem:[#allocation4 + $0x40] sm:$0xff]
          %v303 = vld [vmem:[#allocation4 + $0x48] sm:$0xff]
          %v304 = vld [vmem:[#allocation4 + $0x50] sm:$0xff]
          %v305 = vld [vmem:[#allocation4 + $0x58] sm:$0xff]
          %v306 = vld [vmem:[#allocation4 + $0x60] sm:$0xff]
          %v307 = vld [vmem:[#allocation4 + $0x68] sm:$0xff]
          %v308 = vld [vmem:[#allocation4 + $0x70] sm:$0xff]
          %v309 = vld [vmem:[#allocation4 + $0x78] sm:$0xff]
          %310 = vst [vmem:[#allocation2] sm:$0xff] %v294
          %311 = vst [vmem:[#allocation2 + $0x8] sm:$0xff] %v295
          %312 = vst [vmem:[#allocation2 + $0x10] sm:$0xff] %v296
          %313 = vst [vmem:[#allocation2 + $0x18] sm:$0xff] %v297
          %314 = vst [vmem:[#allocation2 + $0x20] sm:$0xff] %v298
          %315 = vst [vmem:[#allocation2 + $0x28] sm:$0xff] %v299
          %316 = vst [vmem:[#allocation2 + $0x30] sm:$0xff] %v300
          %317 = vst [vmem:[#allocation2 + $0x38] sm:$0xff] %v301
          %318 = vst [vmem:[#allocation2 + $0x40] sm:$0xff] %v302
          %319 = vst [vmem:[#allocation2 + $0x48] sm:$0xff] %v303
          %320 = vst [vmem:[#allocation2 + $0x50] sm:$0xff] %v304
          %321 = vst [vmem:[#allocation2 + $0x58] sm:$0xff] %v305
          %322 = vst [vmem:[#allocation2 + $0x60] sm:$0xff] %v306
          %323 = vst [vmem:[#allocation2 + $0x68] sm:$0xff] %v307
          %324 = vst [vmem:[#allocation2 + $0x70] sm:$0xff] %v308
          %325 = vst [vmem:[#allocation2 + $0x78] sm:$0xff] %v309
        $region52: #{tpu_custom_call.1} parent=35 // pred_fallthru
          _
        %p326 = pnand %p286, %p289
        %p327 = pneg %p326
        // Predicated region
        $region53: #{tpu_custom_call.1} parent=35 // pred_check
          _
        $region54: #{tpu_custom_call.1} parent=35 // pred_check_branch
          %329 = sbr.rel (%p326) target = $region56
        $region55: #{tpu_custom_call.1} parent=35 // pred_region
          %v330 = vld [vmem:[#allocation2] sm:$0xff]
          %v331 = vld [vmem:[#allocation2 + $0x8] sm:$0xff]
          %v332 = vld [vmem:[#allocation2 + $0x10] sm:$0xff]
          %v333 = vld [vmem:[#allocation2 + $0x18] sm:$0xff]
          %v334 = vld [vmem:[#allocation2 + $0x20] sm:$0xff]
          %v335 = vld [vmem:[#allocation2 + $0x28] sm:$0xff]
          %v336 = vld [vmem:[#allocation2 + $0x30] sm:$0xff]
          %v337 = vld [vmem:[#allocation2 + $0x38] sm:$0xff]
          %v338 = vld [vmem:[#allocation2 + $0x40] sm:$0xff]
          %v339 = vld [vmem:[#allocation2 + $0x48] sm:$0xff]
          %v340 = vld [vmem:[#allocation2 + $0x50] sm:$0xff]
          %v341 = vld [vmem:[#allocation2 + $0x58] sm:$0xff]
          %v342 = vld [vmem:[#allocation2 + $0x60] sm:$0xff]
          %v343 = vld [vmem:[#allocation2 + $0x68] sm:$0xff]
          %v344 = vld [vmem:[#allocation2 + $0x70] sm:$0xff]
          %v345 = vld [vmem:[#allocation2 + $0x78] sm:$0xff]
          %v346 = vld [vmem:[%s252] sm:$0xff]
          %v347 = vld [vmem:[%s252 + $0x8] sm:$0xff]
          %v348 = vld [vmem:[%s252 + $0x10] sm:$0xff]
          %v349 = vld [vmem:[%s252 + $0x18] sm:$0xff]
          %v350 = vld [vmem:[%s252 + $0x20] sm:$0xff]
          %v351 = vld [vmem:[%s252 + $0x28] sm:$0xff]
          %v352 = vld [vmem:[%s252 + $0x30] sm:$0xff]
          %v353 = vld [vmem:[%s252 + $0x38] sm:$0xff]
          %v354 = vld [vmem:[%s252 + $0x40] sm:$0xff]
          %v355 = vld [vmem:[%s252 + $0x48] sm:$0xff]
          %v356 = vld [vmem:[%s252 + $0x50] sm:$0xff]
          %v357 = vld [vmem:[%s252 + $0x58] sm:$0xff]
          %v358 = vld [vmem:[%s252 + $0x60] sm:$0xff]
          %v359 = vld [vmem:[%s252 + $0x68] sm:$0xff]
          %v360 = vld [vmem:[%s252 + $0x70] sm:$0xff]
          %v361 = vld [vmem:[%s252 + $0x78] sm:$0xff]
          %362 = vmatprep.subr.mxu0 0.0
          %363 = vmatpush1.msra.mxu0 %v361
          %364 = vmatprep.subr.mxu0 0.0
          %365 = vmatpush1.msra.mxu0 %v360
          %366 = vmatprep.subr.mxu0 0.0
          %367 = vmatpush1.msra.mxu0 %v359
          %368 = vmatprep.subr.mxu0 0.0
          %369 = vmatpush1.msra.mxu0 %v358
          %370 = vmatprep.subr.mxu0 0.0
          %371 = vmatpush1.msra.mxu0 %v357
          %372 = vmatprep.subr.mxu0 0.0
          %373 = vmatpush1.msra.mxu0 %v356
          %374 = vmatprep.subr.mxu0 0.0
          %375 = vmatpush1.msra.mxu0 %v355
          %376 = vmatprep.subr.mxu0 0.0
          %377 = vmatpush1.msra.mxu0 %v354
          %378 = vmatprep.subr.mxu0 0.0
          %379 = vmatpush1.msra.mxu0 %v353
          %380 = vmatprep.subr.mxu0 0.0
          %381 = vmatpush1.msra.mxu0 %v352
          %382 = vmatprep.subr.mxu0 0.0
          %383 = vmatpush1.msra.mxu0 %v351
          %384 = vmatprep.subr.mxu0 0.0
          %385 = vmatpush1.msra.mxu0 %v350
          %386 = vmatprep.subr.mxu0 0.0
          %387 = vmatpush1.msra.mxu0 %v349
          %388 = vmatprep.subr.mxu0 0.0
          %389 = vmatpush1.msra.mxu0 %v348
          %390 = vmatprep.subr.mxu0 0.0
          %391 = vmatpush1.msra.mxu0 %v347
          %392 = vmatprep.subr.mxu0 0.0
          %393 = vmatpush1.msra.mxu0 %v346
          %394 = vmatprep.subr.mxu0 0.0
          %395 = vmatpush2.msra.mxu0 0.0
          %396 = vmatprep.subr.mxu0 0.0
          %397 = vmatpush2.msra.mxu0 0.0
          %398 = vmatprep.subr.mxu0 0.0
          %399 = vmatpush2.msra.mxu0 0.0
          %400 = vmatprep.subr.mxu0 0.0
          %401 = vmatpush2.msra.mxu0 0.0
          %402 = vmatprep.subr.mxu0 0.0
          %403 = vmatpush2.msra.mxu0 0.0
          %404 = vmatprep.subr.mxu0 0.0
          %405 = vmatpush2.msra.mxu0 0.0
          %406 = vmatprep.subr.mxu0 0.0
          %407 = vmatpush2.msra.mxu0 0.0
          %408 = vmatprep.subr.mxu0 0.0
          %409 = vmatpush2.msra.mxu0 0.0
          %410 = vmatprep.subr.mxu0 0.0
          %411 = vmatpush2.msra.mxu0 0.0
          %412 = vmatprep.subr.mxu0 0.0
          %413 = vmatpush2.msra.mxu0 0.0
          %414 = vmatprep.subr.mxu0 0.0
          %415 = vmatpush2.msra.mxu0 0.0
          %416 = vmatprep.subr.mxu0 0.0
          %417 = vmatpush2.msra.mxu0 0.0
          %418 = vmatprep.subr.mxu0 0.0
          %419 = vmatpush2.msra.mxu0 0.0
          %420 = vmatprep.subr.mxu0 0.0
          %421 = vmatpush2.msra.mxu0 0.0
          %422 = vmatprep.subr.mxu0 0.0
          %423 = vmatpush2.msra.mxu0 0.0
          %424 = vmatprep.subr.mxu0 0.0
          %425 = vmatpush2.msra.mxu0 0.0
          %426 = vmatprep.mubr.f32.mxu0 0.0
          %427 = vmatmul.mubr.f32.gmra.mxu0 %v330
          %v428 = vpop.f32.mrf.mxu0
          %v429 = vadd.f32 0.0, %v428
          %v430 = vpop.f32.mrf.mxu0
          %431 = vmatprep.mubr.f32.mxu0 0.0
          %432 = vmatmul.mubr.f32.gmra.mxu0 %v331
          %v433 = vpop.f32.mrf.mxu0
          %v434 = vadd.f32 0.0, %v433
          %v435 = vpop.f32.mrf.mxu0
          %436 = vmatprep.mubr.f32.mxu0 0.0
          %437 = vmatmul.mubr.f32.gmra.mxu0 %v332
          %v438 = vpop.f32.mrf.mxu0
          %v439 = vadd.f32 0.0, %v438
          %v440 = vpop.f32.mrf.mxu0
          %441 = vmatprep.mubr.f32.mxu0 0.0
          %442 = vmatmul.mubr.f32.gmra.mxu0 %v333
          %v443 = vpop.f32.mrf.mxu0
          %v444 = vadd.f32 0.0, %v443
          %v445 = vpop.f32.mrf.mxu0
          %446 = vmatprep.mubr.f32.mxu0 0.0
          %447 = vmatmul.mubr.f32.gmra.mxu0 %v334
          %v448 = vpop.f32.mrf.mxu0
          %v449 = vadd.f32 0.0, %v448
          %v450 = vpop.f32.mrf.mxu0
          %451 = vmatprep.mubr.f32.mxu0 0.0
          %452 = vmatmul.mubr.f32.gmra.mxu0 %v335
          %v453 = vpop.f32.mrf.mxu0
          %v454 = vadd.f32 0.0, %v453
          %v455 = vpop.f32.mrf.mxu0
          %456 = vmatprep.mubr.f32.mxu0 0.0
          %457 = vmatmul.mubr.f32.gmra.mxu0 %v336
          %v458 = vpop.f32.mrf.mxu0
          %v459 = vadd.f32 0.0, %v458
          %v460 = vpop.f32.mrf.mxu0
          %461 = vmatprep.mubr.f32.mxu0 0.0
          %462 = vmatmul.mubr.f32.gmra.mxu0 %v337
          %v463 = vpop.f32.mrf.mxu0
          %v464 = vadd.f32 0.0, %v463
          %v465 = vpop.f32.mrf.mxu0
          %466 = vmatprep.mubr.f32.mxu0 0.0
          %467 = vmatmul.mubr.f32.gmra.mxu0 %v338
          %v468 = vpop.f32.mrf.mxu0
          %v469 = vadd.f32 0.0, %v468
          %v470 = vpop.f32.mrf.mxu0
          %471 = vmatprep.mubr.f32.mxu0 0.0
          %472 = vmatmul.mubr.f32.gmra.mxu0 %v339
          %v473 = vpop.f32.mrf.mxu0
          %v474 = vadd.f32 0.0, %v473
          %v475 = vpop.f32.mrf.mxu0
          %476 = vmatprep.mubr.f32.mxu0 0.0
          %477 = vmatmul.mubr.f32.gmra.mxu0 %v340
          %v478 = vpop.f32.mrf.mxu0
          %v479 = vadd.f32 0.0, %v478
          %v480 = vpop.f32.mrf.mxu0
          %481 = vmatprep.mubr.f32.mxu0 0.0
          %482 = vmatmul.mubr.f32.gmra.mxu0 %v341
          %v483 = vpop.f32.mrf.mxu0
          %v484 = vadd.f32 0.0, %v483
          %v485 = vpop.f32.mrf.mxu0
          %486 = vmatprep.mubr.f32.mxu0 0.0
          %487 = vmatmul.mubr.f32.gmra.mxu0 %v342
          %v488 = vpop.f32.mrf.mxu0
          %v489 = vadd.f32 0.0, %v488
          %v490 = vpop.f32.mrf.mxu0
          %491 = vmatprep.mubr.f32.mxu0 0.0
          %492 = vmatmul.mubr.f32.gmra.mxu0 %v343
          %v493 = vpop.f32.mrf.mxu0
          %v494 = vadd.f32 0.0, %v493
          %v495 = vpop.f32.mrf.mxu0
          %496 = vmatprep.mubr.f32.mxu0 0.0
          %497 = vmatmul.mubr.f32.gmra.mxu0 %v344
          %v498 = vpop.f32.mrf.mxu0
          %v499 = vadd.f32 0.0, %v498
          %v500 = vpop.f32.mrf.mxu0
          %501 = vmatprep.mubr.f32.mxu0 0.0
          %502 = vmatmul.mubr.f32.gmra.mxu0 %v345
          %v503 = vpop.f32.mrf.mxu0
          %v504 = vadd.f32 0.0, %v503
          %v505 = vpop.f32.mrf.mxu0
          %506 = vdwg.mxu0
          %v507 = vpack.c.bf16 %v434, %v429
          %v508 = vpack.c.bf16 %v444, %v439
          %v509 = vpack.c.bf16 %v454, %v449
          %v510 = vpack.c.bf16 %v464, %v459
          %v511 = vpack.c.bf16 %v474, %v469
          %v512 = vpack.c.bf16 %v484, %v479
          %v513 = vpack.c.bf16 %v494, %v489
          %v514 = vpack.c.bf16 %v504, %v499
          %v523 = vunpack.c.l.b16 %v507
          %v524 = vunpack.c.h.b16 %v507
          %v525 = vunpack.c.l.b16 %v508
          %v526 = vunpack.c.h.b16 %v508
          %v527 = vunpack.c.l.b16 %v509
          %v528 = vunpack.c.h.b16 %v509
          %v529 = vunpack.c.l.b16 %v510
          %v530 = vunpack.c.h.b16 %v510
          %v531 = vunpack.c.l.b16 %v511
          %v532 = vunpack.c.h.b16 %v511
          %v533 = vunpack.c.l.b16 %v512
          %v534 = vunpack.c.h.b16 %v512
          %v535 = vunpack.c.l.b16 %v513
          %v536 = vunpack.c.h.b16 %v513
          %v537 = vunpack.c.l.b16 %v514
          %v538 = vunpack.c.h.b16 %v514
          %v539 = vpack.c.b16 %v523, %v523
          %v540 = vpack.c.b16 %v524, %v524
          %v541 = vpack.c.b16 %v525, %v525
          %v542 = vpack.c.b16 %v526, %v526
          %v543 = vpack.c.b16 %v527, %v527
          %v544 = vpack.c.b16 %v528, %v528
          %v545 = vpack.c.b16 %v529, %v529
          %v546 = vpack.c.b16 %v530, %v530
          %v547 = vpack.c.b16 %v531, %v531
          %v548 = vpack.c.b16 %v532, %v532
          %v549 = vpack.c.b16 %v533, %v533
          %v550 = vpack.c.b16 %v534, %v534
          %v551 = vpack.c.b16 %v535, %v535
          %v552 = vpack.c.b16 %v536, %v536
          %v553 = vpack.c.b16 %v537, %v537
          %v554 = vpack.c.b16 %v538, %v538
          %571 = vst [vmem:[#allocation3] sm:$0xf] %v539
          %572 = vst [vmem:[#allocation3 + $0x4] sm:$0xf] %v540
          %573 = vst [vmem:[#allocation3 + $0x8] sm:$0xf] %v541
          %574 = vst [vmem:[#allocation3 + $0xc] sm:$0xf] %v542
          %575 = vst [vmem:[#allocation3 + $0x10] sm:$0xf] %v543
          %576 = vst [vmem:[#allocation3 + $0x14] sm:$0xf] %v544
          %577 = vst [vmem:[#allocation3 + $0x18] sm:$0xf] %v545
          %578 = vst [vmem:[#allocation3 + $0x1c] sm:$0xf] %v546
          %579 = vst [vmem:[#allocation3 + $0x20] sm:$0xf] %v547
          %580 = vst [vmem:[#allocation3 + $0x24] sm:$0xf] %v548
          %581 = vst [vmem:[#allocation3 + $0x28] sm:$0xf] %v549
          %582 = vst [vmem:[#allocation3 + $0x2c] sm:$0xf] %v550
          %583 = vst [vmem:[#allocation3 + $0x30] sm:$0xf] %v551
          %584 = vst [vmem:[#allocation3 + $0x34] sm:$0xf] %v552
          %585 = vst [vmem:[#allocation3 + $0x38] sm:$0xf] %v553
          %586 = vst [vmem:[#allocation3 + $0x3c] sm:$0xf] %v554
        $region56: #{tpu_custom_call.1} parent=35 // pred_fallthru
          _
        // Predicated region
        $region57: #{tpu_custom_call.1} parent=35 // pred_check
          %p587 = pneg %p289
        $region58: #{tpu_custom_call.1} parent=35 // pred_check_branch
          %589 = sbr.rel (%p587) target = $region60
        $region59: #{tpu_custom_call.1} parent=35 // pred_region
          %v590 = vld [vmem:[%s281] sm:$0x1]
          %v592 = vlaneseq
          %v593 = vshrl.u32 %v592, 7
          %v594 = vsub.s32 0, %v593
          %v595 = vrot.slane %v590, %v594
          %597 = vst [vmem:[#allocation10] sm:$0xff] %v595
          %598 = vst [vmem:[#allocation10 + $0x8] sm:$0xff] %v595
          %599 = vst [vmem:[#allocation10 + $0x10] sm:$0xff] %v595
          %600 = vst [vmem:[#allocation10 + $0x18] sm:$0xff] %v595
          %601 = vst [vmem:[#allocation10 + $0x20] sm:$0xff] %v595
          %602 = vst [vmem:[#allocation10 + $0x28] sm:$0xff] %v595
          %603 = vst [vmem:[#allocation10 + $0x30] sm:$0xff] %v595
          %604 = vst [vmem:[#allocation10 + $0x38] sm:$0xff] %v595
          %605 = vst [vmem:[#allocation10 + $0x40] sm:$0xff] %v595
          %606 = vst [vmem:[#allocation10 + $0x48] sm:$0xff] %v595
          %607 = vst [vmem:[#allocation10 + $0x50] sm:$0xff] %v595
          %608 = vst [vmem:[#allocation10 + $0x58] sm:$0xff] %v595
          %609 = vst [vmem:[#allocation10 + $0x60] sm:$0xff] %v595
          %610 = vst [vmem:[#allocation10 + $0x68] sm:$0xff] %v595
          %611 = vst [vmem:[#allocation10 + $0x70] sm:$0xff] %v595
          %612 = vst [vmem:[#allocation10 + $0x78] sm:$0xff] %v595
        $region60: #{tpu_custom_call.1} parent=35 // pred_fallthru
          _
        %s613 = smul.u32 %s27, 128
        %v614 = vld [vmem:[#allocation10] sm:$0xff]
        %v615 = vld [vmem:[#allocation10 + $0x8] sm:$0xff]
        %v616 = vld [vmem:[#allocation10 + $0x10] sm:$0xff]
        %v617 = vld [vmem:[#allocation10 + $0x18] sm:$0xff]
        %v618 = vld [vmem:[#allocation10 + $0x20] sm:$0xff]
        %v619 = vld [vmem:[#allocation10 + $0x28] sm:$0xff]
        %v620 = vld [vmem:[#allocation10 + $0x30] sm:$0xff]
        %v621 = vld [vmem:[#allocation10 + $0x38] sm:$0xff]
        %v622 = vld [vmem:[#allocation10 + $0x40] sm:$0xff]
        %v623 = vld [vmem:[#allocation10 + $0x48] sm:$0xff]
        %v624 = vld [vmem:[#allocation10 + $0x50] sm:$0xff]
        %v625 = vld [vmem:[#allocation10 + $0x58] sm:$0xff]
        %v626 = vld [vmem:[#allocation10 + $0x60] sm:$0xff]
        %v627 = vld [vmem:[#allocation10 + $0x68] sm:$0xff]
        %v628 = vld [vmem:[#allocation10 + $0x70] sm:$0xff]
        %v629 = vld [vmem:[#allocation10 + $0x78] sm:$0xff]
        %v630 = vld [vmem:[#allocation9] sm:$0xf]
        %v631 = vld [vmem:[#allocation9 + $0x4] sm:$0xf]
        %v632 = vld [vmem:[#allocation9 + $0x8] sm:$0xf]
        %v633 = vld [vmem:[#allocation9 + $0xc] sm:$0xf]
        %v634 = vld [vmem:[#allocation9 + $0x10] sm:$0xf]
        %v635 = vld [vmem:[#allocation9 + $0x14] sm:$0xf]
        %v636 = vld [vmem:[#allocation9 + $0x18] sm:$0xf]
        %v637 = vld [vmem:[#allocation9 + $0x1c] sm:$0xf]
        %v638 = vld [vmem:[#allocation9 + $0x20] sm:$0xf]
        %v639 = vld [vmem:[#allocation9 + $0x24] sm:$0xf]
        %v640 = vld [vmem:[#allocation9 + $0x28] sm:$0xf]
        %v641 = vld [vmem:[#allocation9 + $0x2c] sm:$0xf]
        %v642 = vld [vmem:[#allocation9 + $0x30] sm:$0xf]
        %v643 = vld [vmem:[#allocation9 + $0x34] sm:$0xf]
        %v644 = vld [vmem:[#allocation9 + $0x38] sm:$0xf]
        %v645 = vld [vmem:[#allocation9 + $0x3c] sm:$0xf]
        %s646 = sshra.s32 %s613, 3
        %s647 = sand.u32 %s613, 7
        %s648 = smul.addr %s646, 4
        %s649 = scalar_lea.vmem [#allocation3], %s648
        %v650 = vld [vmem:[%s649] sm:$0xf]
        %v651 = vld [vmem:[%s649 + $0x4] sm:$0xf]
        %v652 = vld [vmem:[%s649 + $0x8] sm:$0xf]
        %v653 = vld [vmem:[%s649 + $0xc] sm:$0xf]
        %v654 = vld [vmem:[%s649 + $0x10] sm:$0xf]
        %v655 = vld [vmem:[%s649 + $0x14] sm:$0xf]
        %v656 = vld [vmem:[%s649 + $0x18] sm:$0xf]
        %v657 = vld [vmem:[%s649 + $0x1c] sm:$0xf]
        %v658 = vld [vmem:[%s649 + $0x20] sm:$0xf]
        %v659 = vld [vmem:[%s649 + $0x24] sm:$0xf]
        %v660 = vld [vmem:[%s649 + $0x28] sm:$0xf]
        %v661 = vld [vmem:[%s649 + $0x2c] sm:$0xf]
        %v662 = vld [vmem:[%s649 + $0x30] sm:$0xf]
        %v663 = vld [vmem:[%s649 + $0x34] sm:$0xf]
        %v664 = vld [vmem:[%s649 + $0x38] sm:$0xf]
        %v665 = vld [vmem:[%s649 + $0x3c] sm:$0xf]
        %v682 = vunpack.c.l.b16 %v630
        %v683 = vunpack.c.l.b16 %v631
        %v684 = vunpack.c.l.b16 %v632
        %v685 = vunpack.c.l.b16 %v633
        %v686 = vunpack.c.l.b16 %v634
        %v687 = vunpack.c.l.b16 %v635
        %v688 = vunpack.c.l.b16 %v636
        %v689 = vunpack.c.l.b16 %v637
        %v690 = vunpack.c.l.b16 %v638
        %v691 = vunpack.c.l.b16 %v639
        %v692 = vunpack.c.l.b16 %v640
        %v693 = vunpack.c.l.b16 %v641
        %v694 = vunpack.c.l.b16 %v642
        %v695 = vunpack.c.l.b16 %v643
        %v696 = vunpack.c.l.b16 %v644
        %v697 = vunpack.c.l.b16 %v645
        %v698 = vpack.c.b16 %v683, %v682
        %v699 = vpack.c.b16 %v685, %v684
        %v700 = vpack.c.b16 %v687, %v686
        %v701 = vpack.c.b16 %v689, %v688
        %v702 = vpack.c.b16 %v691, %v690
        %v703 = vpack.c.b16 %v693, %v692
        %v704 = vpack.c.b16 %v695, %v694
        %v705 = vpack.c.b16 %v697, %v696
        %v730 = vunpack.c.l.b16 %v650
        %v731 = vunpack.c.l.b16 %v651
        %v732 = vunpack.c.l.b16 %v652
        %v733 = vunpack.c.l.b16 %v653
        %v734 = vunpack.c.l.b16 %v654
        %v735 = vunpack.c.l.b16 %v655
        %v736 = vunpack.c.l.b16 %v656
        %v737 = vunpack.c.l.b16 %v657
        %v738 = vunpack.c.l.b16 %v658
        %v739 = vunpack.c.l.b16 %v659
        %v740 = vunpack.c.l.b16 %v660
        %v741 = vunpack.c.l.b16 %v661
        %v742 = vunpack.c.l.b16 %v662
        %v743 = vunpack.c.l.b16 %v663
        %v744 = vunpack.c.l.b16 %v664
        %v745 = vunpack.c.l.b16 %v665
        %v746 = vpack.c.b16 %v731, %v730
        %v747 = vpack.c.b16 %v733, %v732
        %v748 = vpack.c.b16 %v735, %v734
        %v749 = vpack.c.b16 %v737, %v736
        %v750 = vpack.c.b16 %v739, %v738
        %v751 = vpack.c.b16 %v741, %v740
        %v752 = vpack.c.b16 %v743, %v742
        %v753 = vpack.c.b16 %v745, %v744
        %762 = vmatprep.subr.bf16.mxu0 0
        %763 = vmatpush1.bf16.msra.mxu0 %v753
        %764 = vmatprep.subr.bf16.mxu0 0
        %765 = vmatpush1.bf16.msra.mxu0 %v752
        %766 = vmatprep.subr.bf16.mxu0 0
        %767 = vmatpush1.bf16.msra.mxu0 %v751
        %768 = vmatprep.subr.bf16.mxu0 0
        %769 = vmatpush1.bf16.msra.mxu0 %v750
        %770 = vmatprep.subr.bf16.mxu0 0
        %771 = vmatpush1.bf16.msra.mxu0 %v749
        %772 = vmatprep.subr.bf16.mxu0 0
        %773 = vmatpush1.bf16.msra.mxu0 %v748
        %774 = vmatprep.subr.bf16.mxu0 0
        %775 = vmatpush1.bf16.msra.mxu0 %v747
        %776 = vmatprep.subr.bf16.mxu0 0
        %777 = vmatpush1.bf16.msra.mxu0 %v746
        %778 = vmatprep.subr.bf16.mxu0 0
        %779 = vmatpush2.bf16.msra.mxu0 0
        %780 = vmatprep.subr.bf16.mxu0 0
        %781 = vmatpush2.bf16.msra.mxu0 0
        %782 = vmatprep.subr.bf16.mxu0 0
        %783 = vmatpush2.bf16.msra.mxu0 0
        %784 = vmatprep.subr.bf16.mxu0 0
        %785 = vmatpush2.bf16.msra.mxu0 0
        %786 = vmatprep.subr.bf16.mxu0 0
        %787 = vmatpush2.bf16.msra.mxu0 0
        %788 = vmatprep.subr.bf16.mxu0 0
        %789 = vmatpush2.bf16.msra.mxu0 0
        %790 = vmatprep.subr.bf16.mxu0 0
        %791 = vmatpush2.bf16.msra.mxu0 0
        %792 = vmatprep.subr.bf16.mxu0 0
        %793 = vmatpush2.bf16.msra.mxu0 0
        %794 = vmatprep.mubr.bf16.mxu0 0
        %795 = vmatmul.mubr.bf16.gmra.mxu0 %v698
        %v796 = vpop.f32.mrf.mxu0
        %v797 = vadd.f32 0.0, %v796
        %v798 = vpop.f32.mrf.mxu0
        %v799 = vpop.f32.mrf.mxu0
        %v800 = vadd.f32 0.0, %v799
        %v801 = vpop.f32.mrf.mxu0
        %802 = vmatprep.mubr.bf16.mxu0 0
        %803 = vmatmul.mubr.bf16.gmra.mxu0 %v699
        %v804 = vpop.f32.mrf.mxu0
        %v805 = vadd.f32 0.0, %v804
        %v806 = vpop.f32.mrf.mxu0
        %v807 = vpop.f32.mrf.mxu0
        %v808 = vadd.f32 0.0, %v807
        %v809 = vpop.f32.mrf.mxu0
        %810 = vmatprep.mubr.bf16.mxu0 0
        %811 = vmatmul.mubr.bf16.gmra.mxu0 %v700
        %v812 = vpop.f32.mrf.mxu0
        %v813 = vadd.f32 0.0, %v812
        %v814 = vpop.f32.mrf.mxu0
        %v815 = vpop.f32.mrf.mxu0
        %v816 = vadd.f32 0.0, %v815
        %v817 = vpop.f32.mrf.mxu0
        %818 = vmatprep.mubr.bf16.mxu0 0
        %819 = vmatmul.mubr.bf16.gmra.mxu0 %v701
        %v820 = vpop.f32.mrf.mxu0
        %v821 = vadd.f32 0.0, %v820
        %v822 = vpop.f32.mrf.mxu0
        %v823 = vpop.f32.mrf.mxu0
        %v824 = vadd.f32 0.0, %v823
        %v825 = vpop.f32.mrf.mxu0
        %826 = vmatprep.mubr.bf16.mxu0 0
        %827 = vmatmul.mubr.bf16.gmra.mxu0 %v702
        %v828 = vpop.f32.mrf.mxu0
        %v829 = vadd.f32 0.0, %v828
        %v830 = vpop.f32.mrf.mxu0
        %v831 = vpop.f32.mrf.mxu0
        %v832 = vadd.f32 0.0, %v831
        %v833 = vpop.f32.mrf.mxu0
        %834 = vmatprep.mubr.bf16.mxu0 0
        %835 = vmatmul.mubr.bf16.gmra.mxu0 %v703
        %v836 = vpop.f32.mrf.mxu0
        %v837 = vadd.f32 0.0, %v836
        %v838 = vpop.f32.mrf.mxu0
        %v839 = vpop.f32.mrf.mxu0
        %v840 = vadd.f32 0.0, %v839
        %v841 = vpop.f32.mrf.mxu0
        %842 = vmatprep.mubr.bf16.mxu0 0
        %843 = vmatmul.mubr.bf16.gmra.mxu0 %v704
        %v844 = vpop.f32.mrf.mxu0
        %v845 = vadd.f32 0.0, %v844
        %v846 = vpop.f32.mrf.mxu0
        %v847 = vpop.f32.mrf.mxu0
        %v848 = vadd.f32 0.0, %v847
        %v849 = vpop.f32.mrf.mxu0
        %850 = vmatprep.mubr.bf16.mxu0 0
        %851 = vmatmul.mubr.bf16.gmra.mxu0 %v705
        %v852 = vpop.f32.mrf.mxu0
        %v853 = vadd.f32 0.0, %v852
        %v854 = vpop.f32.mrf.mxu0
        %v855 = vpop.f32.mrf.mxu0
        %v856 = vadd.f32 0.0, %v855
        %v857 = vpop.f32.mrf.mxu0
        %858 = vdwg.mxu0
        %v859 = vadd.f32 %v614, %v797
        %v860 = vadd.f32 %v615, %v800
        %v861 = vadd.f32 %v616, %v805
        %v862 = vadd.f32 %v617, %v808
        %v863 = vadd.f32 %v618, %v813
        %v864 = vadd.f32 %v619, %v816
        %v865 = vadd.f32 %v620, %v821
        %v866 = vadd.f32 %v621, %v824
        %v867 = vadd.f32 %v622, %v829
        %v868 = vadd.f32 %v623, %v832
        %v869 = vadd.f32 %v624, %v837
        %v870 = vadd.f32 %v625, %v840
        %v871 = vadd.f32 %v626, %v845
        %v872 = vadd.f32 %v627, %v848
        %v873 = vadd.f32 %v628, %v853
        %v874 = vadd.f32 %v629, %v856
        %875 = vst [vmem:[#allocation10] sm:$0xff] %v859
        %876 = vst [vmem:[#allocation10 + $0x8] sm:$0xff] %v860
        %877 = vst [vmem:[#allocation10 + $0x10] sm:$0xff] %v861
        %878 = vst [vmem:[#allocation10 + $0x18] sm:$0xff] %v862
        %879 = vst [vmem:[#allocation10 + $0x20] sm:$0xff] %v863
        %880 = vst [vmem:[#allocation10 + $0x28] sm:$0xff] %v864
        %881 = vst [vmem:[#allocation10 + $0x30] sm:$0xff] %v865
        %882 = vst [vmem:[#allocation10 + $0x38] sm:$0xff] %v866
        %883 = vst [vmem:[#allocation10 + $0x40] sm:$0xff] %v867
        %884 = vst [vmem:[#allocation10 + $0x48] sm:$0xff] %v868
        %885 = vst [vmem:[#allocation10 + $0x50] sm:$0xff] %v869
        %886 = vst [vmem:[#allocation10 + $0x58] sm:$0xff] %v870
        %887 = vst [vmem:[#allocation10 + $0x60] sm:$0xff] %v871
        %888 = vst [vmem:[#allocation10 + $0x68] sm:$0xff] %v872
        %889 = vst [vmem:[#allocation10 + $0x70] sm:$0xff] %v873
        %890 = vst [vmem:[#allocation10 + $0x78] sm:$0xff] %v874
        %p891 = scmp.lt.s32.totalorder %s25, 2
        %p892 = pnand %p289, %p891
        %p893 = pneg %p892
        // Predicated region
        $region61: #{tpu_custom_call.1} parent=35 // pred_check
          _
        $region62: #{tpu_custom_call.1} parent=35 // pred_check_branch
          %895 = sbr.rel (%p892) target = $region64
        $region63: #{tpu_custom_call.1} parent=35 // pred_region
          %s896 = smul.u32 %s26, 128
          %v897 = vld [vmem:[#allocation10] sm:$0xff]
          %v898 = vld [vmem:[#allocation10 + $0x8] sm:$0xff]
          %v899 = vld [vmem:[#allocation10 + $0x10] sm:$0xff]
          %v900 = vld [vmem:[#allocation10 + $0x18] sm:$0xff]
          %v901 = vld [vmem:[#allocation10 + $0x20] sm:$0xff]
          %v902 = vld [vmem:[#allocation10 + $0x28] sm:$0xff]
          %v903 = vld [vmem:[#allocation10 + $0x30] sm:$0xff]
          %v904 = vld [vmem:[#allocation10 + $0x38] sm:$0xff]
          %v905 = vld [vmem:[#allocation10 + $0x40] sm:$0xff]
          %v906 = vld [vmem:[#allocation10 + $0x48] sm:$0xff]
          %v907 = vld [vmem:[#allocation10 + $0x50] sm:$0xff]
          %v908 = vld [vmem:[#allocation10 + $0x58] sm:$0xff]
          %v909 = vld [vmem:[#allocation10 + $0x60] sm:$0xff]
          %v910 = vld [vmem:[#allocation10 + $0x68] sm:$0xff]
          %v911 = vld [vmem:[#allocation10 + $0x70] sm:$0xff]
          %v912 = vld [vmem:[#allocation10 + $0x78] sm:$0xff]
          %v913 = vmax.f32 %v897, 0.0
          %v914 = vmax.f32 %v898, 0.0
          %v915 = vmax.f32 %v899, 0.0
          %v916 = vmax.f32 %v900, 0.0
          %v917 = vmax.f32 %v901, 0.0
          %v918 = vmax.f32 %v902, 0.0
          %v919 = vmax.f32 %v903, 0.0
          %v920 = vmax.f32 %v904, 0.0
          %v921 = vmax.f32 %v905, 0.0
          %v922 = vmax.f32 %v906, 0.0
          %v923 = vmax.f32 %v907, 0.0
          %v924 = vmax.f32 %v908, 0.0
          %v925 = vmax.f32 %v909, 0.0
          %v926 = vmax.f32 %v910, 0.0
          %v927 = vmax.f32 %v911, 0.0
          %v928 = vmax.f32 %v912, 0.0
          %s929 = scalar_lea.vmem [#allocation2], %s896
          %930 = vst [vmem:[%s929] sm:$0xff] %v913
          %931 = vst [vmem:[%s929 + $0x8] sm:$0xff] %v914
          %932 = vst [vmem:[%s929 + $0x10] sm:$0xff] %v915
          %933 = vst [vmem:[%s929 + $0x18] sm:$0xff] %v916
          %934 = vst [vmem:[%s929 + $0x20] sm:$0xff] %v917
          %935 = vst [vmem:[%s929 + $0x28] sm:$0xff] %v918
          %936 = vst [vmem:[%s929 + $0x30] sm:$0xff] %v919
          %937 = vst [vmem:[%s929 + $0x38] sm:$0xff] %v920
          %938 = vst [vmem:[%s929 + $0x40] sm:$0xff] %v921
          %939 = vst [vmem:[%s929 + $0x48] sm:$0xff] %v922
          %940 = vst [vmem:[%s929 + $0x50] sm:$0xff] %v923
          %941 = vst [vmem:[%s929 + $0x58] sm:$0xff] %v924
          %942 = vst [vmem:[%s929 + $0x60] sm:$0xff] %v925
          %943 = vst [vmem:[%s929 + $0x68] sm:$0xff] %v926
          %944 = vst [vmem:[%s929 + $0x70] sm:$0xff] %v927
          %945 = vst [vmem:[%s929 + $0x78] sm:$0xff] %v928
        $region64: #{tpu_custom_call.1} parent=35 // pred_fallthru
          _
        // Predicated region
        $region65: #{tpu_custom_call.1} parent=35 // pred_check
          %p946 = pneg %p158
        $region66: #{tpu_custom_call.1} parent=35 // pred_check_branch
          %948 = sbr.rel (%p946) target = $region68
        $region67: #{tpu_custom_call.1} parent=35 // pred_region
          %s949 = smul.u32 16, %s26
          %s951 = ssub.s32 2048, 2048
          %952 = vsyncadd [#allocation6], %s951
          %s953 = smul.addr %s949, 128
          %s954 = scalar_lea.hbm %s4, %s953
          %s955 = sshll.u32 [#allocation10], 4
          %s956 = int_to_ptr.vmem [resolvable:$true] %s955
          %961 = dma.vmem_to_hbm [thread:$0]  %s956, 2048, %s954, [#allocation6], 128, 128, 8
        $region68: #{tpu_custom_call.1} parent=35 // pred_fallthru
          _
        // Predicated region
        $region69: #{tpu_custom_call.1} parent=35 // pred_check
          %p962 = pneg %p158
        $region70: #{tpu_custom_call.1} parent=35 // pred_check_branch
          %964 = sbr.rel (%p962) target = $region72
        $region71: #{tpu_custom_call.1} parent=35 // pred_region
          %965 = dma.done [#allocation6], 2048
        $region72: #{tpu_custom_call.1} parent=35 // pred_fallthru
          _
      $region36: #{tpu_custom_call.1} parent=5 // pred_fallthru
        _
      %p966 = scmp.le.s32.totalorder 2, %s15
      // Predicated region
      $region73: #{tpu_custom_call.1} parent=5 // pred_check
        %p967 = pneg %p966
      $region74: #{tpu_custom_call.1} parent=5 // pred_check_branch
        %969 = sbr.rel (%p967) target = $region76
      $region75: #{tpu_custom_call.1} parent=5 // pred_region
        %s970 = ssub.s32 %s15, 2
      $region76: #{tpu_custom_call.1} parent=5 // pred_fallthru
        _
    $region6: #{tpu_custom_call.1} parent=1 // loop_footer
      %s19 = sadd.s32 1, %s15
    $region7: #{tpu_custom_call.1} parent=1 // loop_footer_branch
      %14 = sbr.rel target = $region3
    $region8: #{tpu_custom_call.1} parent=1 // loop_exit
      _
    %971 = vsyncpa [#allocation5], 1
    %s972 = scalar_lea.sflag [#allocation5], 1
    %973 = vsyncpa %s972, 1
    %974 = vsyncpa [#allocation8], 1
    %s975 = scalar_lea.sflag [#allocation8], 1
    %976 = vsyncpa %s975, 1
    %977 = vsyncpa [#allocation6], 1
    %s978 = scalar_lea.sflag [#allocation6], 1
    %979 = vsyncpa %s978, 1

</llo_original>
